<compile_context>
chip_gen: v7x
topology: tpu7x:2x2x1
jax: 0.10.0
libtpu: 0.0.40
codegen_flags: <defaults>
</compile_context>

<pallas_src>
import math

import jax
import jax.numpy as jnp
from jax.experimental import pallas as pl
from jax.experimental.pallas import tpu as pltpu

# ---- problem sizes (small, consistent with the module) ----
B = 2            # batch
S = 8            # sequence length
D_MODEL = 32     # d_model
H = 4            # heads
D_K = D_MODEL // H
D_FF = 64        # feed-forward hidden
EPS = 1e-6
NEG_INF = -1e9
BS = B * S       # folded (batch*seq) row count
HBS = H * BS     # stacked per-head key/value rows


def _layer_norm(v, alpha, beta):
    """Matches the PyTorch LayerNormalization: unbiased std, eps added to std."""
    mean = jnp.mean(v, axis=-1, keepdims=True)
    diff = v - mean
    var = jnp.sum(diff * diff, axis=-1, keepdims=True) * (1.0 / (v.shape[-1] - 1))
    std = jnp.sqrt(var)
    # divide -> EUP reciprocal (approx error ~1e-4, covered by 2e-3 tolerance)
    return alpha * (diff * pl.reciprocal(std + EPS, approx=True)) + beta


def encoder_block_kernel(x_ref, bias_ref, hm_ref, seg_ref,
                         wqkv_ref, wo_ref, w1_ref, w2_ref, sp_ref,
                         out_ref):
    """Single invocation, everything VMEM-resident.

    x_ref    : (BS, D)      flattened activations
    bias_ref : (BS, HBS)    additive attention bias, tiled per head
                            (mask + cross-batch block-diag, 0 / -1e9)
    hm_ref   : (HBS, D)     per-head feature masks for the stacked K/V rows
    seg_ref  : (HBS, HBS)   block-diagonal ones (BSxBS blocks) for the
                            segmented softmax denominator matmul
    wqkv_ref : (D, 3D)      fused [Wq^T | Wk^T | Wv^T]
    wo_ref   : (D, D)       Wo^T
    w1_ref   : (D, D_FF)    W1^T ;  w2_ref: (D_FF, D)  W2^T
    sp_ref   : (6, D_FF)    packed small params:
                            rows 0-3 = ln1_a, ln1_b, ln2_a, ln2_b (first D lanes)
                            row  4   = b1 (D_FF lanes), row 5 = b2 (first D lanes)
    out_ref  : (BS, D)
    """
    x = x_ref[...]
    sp = sp_ref[...]
    ln1_a = sp[0:1, :D_MODEL]
    ln1_b = sp[1:2, :D_MODEL]
    ln2_a = sp[2:3, :D_MODEL]
    ln2_b = sp[3:4, :D_MODEL]
    b1 = sp[4:5, :]
    b2 = sp[5:6, :D_MODEL]

    # ---------- residual 1: x + MHA(LN1(x)) ----------
    y = _layer_norm(x, ln1_a, ln1_b)

    qkv = jnp.dot(y, wqkv_ref[...], preferred_element_type=jnp.float32)  # (BS, 3D)
    q = qkv[:, 0:D_MODEL]
    k = qkv[:, D_MODEL:2 * D_MODEL]
    v = qkv[:, 2 * D_MODEL:3 * D_MODEL]

    hm = hm_ref[...]                                    # (HBS, D)
    k_stack = jnp.concatenate([k] * H, axis=0) * hm     # (HBS, D), head-masked
    v_stack = jnp.concatenate([v] * H, axis=0) * hm     # (HBS, D), head-masked

    # all-head scores in one dot (contract over d):  (BS, D) x (HBS, D) -> (BS, HBS)
    s = jnp.einsum('qd,nd->qn', q, k_stack, preferred_element_type=jnp.float32)
    s = s * (1.0 / math.sqrt(D_K)) + bias_ref[...]

    # segmented softmax: no row-max subtraction (inputs are LayerNorm'd, |s| is
    # O(1); -1e9 masked entries underflow exp to exactly 0 in f32).
    p = jnp.exp(s)
    denom = jnp.dot(p, seg_ref[...], preferred_element_type=jnp.float32)  # (BS, HBS)
    p = p * pl.reciprocal(denom, approx=True)

    # context: the head-masked V stack makes the accumulation == head concat.
    ctx = jnp.dot(p, v_stack, preferred_element_type=jnp.float32)        # (BS, D)
    attn = jnp.dot(ctx, wo_ref[...], preferred_element_type=jnp.float32)
    x1 = x + attn                                       # dropout == identity (eval)

    # ---------- residual 2: x1 + FFN(LN2(x1)) ----------
    y2 = _layer_norm(x1, ln2_a, ln2_b)
    hdn = jnp.maximum(
        jnp.dot(y2, w1_ref[...], preferred_element_type=jnp.float32) + b1, 0.0)
    ffn = jnp.dot(hdn, w2_ref[...], preferred_element_type=jnp.float32) + b2

    out_ref[...] = (x1 + ffn).astype(out_ref.dtype)


@jax.jit
def encoder_block(x, mask, params):
    """x: (B,S,D) f32; mask: (B,S,S) int (0 = masked); params: PyTorch-layout weights."""
    (wq, wk, wv, wo, ln1_a, ln1_b, ln2_a, ln2_b, w1, b1, w2, b2) = params
    Bq, Sq, Dq = x.shape
    bs = Bq * Sq

    # ---- host-side (free) layout prep ----
    x2 = x.reshape(bs, Dq)

    # float additive bias; -1e9 off the batch block-diagonal so the folded
    # (BS, BS) attention never attends across batches; tiled per head -> (BS, HBS).
    mask_bias = jnp.where(mask == 0, jnp.float32(NEG_INF), jnp.float32(0.0))  # (B,S,S)
    same_batch = jnp.eye(Bq, dtype=bool)[:, None, :, None]                    # (B,1,B,1)
    attn_bias = jnp.where(same_batch, mask_bias[:, :, None, :],
                          jnp.float32(NEG_INF)).reshape(bs, bs)
    attn_bias_tiled = jnp.tile(attn_bias, (1, H))                             # (BS, HBS)

    # per-head feature masks for the sublane-stacked K/V: row n = head (n // BS)
    hm_rows = ((jnp.arange(Dq)[None, :] // D_K)
               == (jnp.arange(H * bs)[:, None] // bs)).astype(jnp.float32)    # (HBS, D)

    # block-diagonal ones (BSxBS blocks) for the segmented softmax denominator
    seg_ones = ((jnp.arange(H * bs)[:, None] // bs)
                == (jnp.arange(H * bs)[None, :] // bs)).astype(jnp.float32)   # (HBS, HBS)

    # fused QKV projection weights, pre-transposed to (in, out)
    wqkv = jnp.concatenate([wq.T, wk.T, wv.T], axis=1)                        # (D, 3D)

    # packed small parameters -> single DMA
    sp = jnp.zeros((6, D_FF), jnp.float32)
    sp = sp.at[0, :Dq].set(ln1_a)
    sp = sp.at[1, :Dq].set(ln1_b)
    sp = sp.at[2, :Dq].set(ln2_a)
    sp = sp.at[3, :Dq].set(ln2_b)
    sp = sp.at[4, :].set(b1)
    sp = sp.at[5, :Dq].set(b2)

    vmem = pl.BlockSpec(memory_space=pltpu.MemorySpace.VMEM)
    args = (x2, attn_bias_tiled, hm_rows, seg_ones,
            wqkv, wo.T, w1.T, w2.T, sp)

    out = pl.pallas_call(
        encoder_block_kernel,
        out_shape=jax.ShapeDtypeStruct((bs, Dq), jnp.float32),
        in_specs=[vmem] * len(args),
        out_specs=vmem,
    )(*args)
    return out.reshape(Bq, Sq, Dq)


def reference_encoder_block(x, mask, params):
    """Pure-JAX reference mirroring the PyTorch EncoderBlock exactly (eval mode)."""
    (wq, wk, wv, wo, ln1_a, ln1_b, ln2_a, ln2_b, w1, b1, w2, b2) = params

    def layer_norm(v, alpha, beta):
        mean = v.mean(axis=-1, keepdims=True)
        std = jnp.std(v, axis=-1, keepdims=True, ddof=1)   # torch .std() is unbiased
        return alpha * (v - mean) / (std + EPS) + beta

    # residual 1: self-attention
    y = layer_norm(x, ln1_a, ln1_b)
    q = (y @ wq.T).reshape(B, S, H, D_K).transpose(0, 2, 1, 3)
    k = (y @ wk.T).reshape(B, S, H, D_K).transpose(0, 2, 1, 3)
    v = (y @ wv.T).reshape(B, S, H, D_K).transpose(0, 2, 1, 3)
    scores = jnp.einsum('bhqd,bhkd->bhqk', q, k) / math.sqrt(D_K)
    scores = jnp.where(mask[:, None, :, :] == 0, NEG_INF, scores)
    attn = jax.nn.softmax(scores, axis=-1)
    ctx = jnp.einsum('bhqk,bhkd->bhqd', attn, v)
    ctx = ctx.transpose(0, 2, 1, 3).reshape(B, S, D_MODEL)
    x1 = x + ctx @ wo.T

    # residual 2: feed-forward
    y2 = layer_norm(x1, ln2_a, ln2_b)
    ffn = jnp.maximum(y2 @ w1.T + b1, 0.0) @ w2.T + b2
    return x1 + ffn


if __name__ == "__main__":
    key = jax.random.PRNGKey(0)
    ks = jax.random.split(key, 14)

    x = jax.random.normal(ks[0], (B, S, D_MODEL), dtype=jnp.float32)

    # PyTorch Linear (out, in) layout.
    sw = 1.0 / math.sqrt(D_MODEL)
    wq = jax.random.uniform(ks[1], (D_MODEL, D_MODEL), jnp.float32, -sw, sw)
    wk = jax.random.uniform(ks[2], (D_MODEL, D_MODEL), jnp.float32, -sw, sw)
    wv = jax.random.uniform(ks[3], (D_MODEL, D_MODEL), jnp.float32, -sw, sw)
    wo = jax.random.uniform(ks[4], (D_MODEL, D_MODEL), jnp.float32, -sw, sw)

    ln1_a = 1.0 + 0.1 * jax.random.normal(ks[5], (D_MODEL,), jnp.float32)
    ln1_b = 0.1 * jax.random.normal(ks[6], (D_MODEL,), jnp.float32)
    ln2_a = 1.0 + 0.1 * jax.random.normal(ks[7], (D_MODEL,), jnp.float32)
    ln2_b = 0.1 * jax.random.normal(ks[8], (D_MODEL,), jnp.float32)

    w1 = jax.random.uniform(ks[9], (D_FF, D_MODEL), jnp.float32, -sw, sw)
    b1 = jax.random.uniform(ks[10], (D_FF,), jnp.float32, -sw, sw)
    sf2 = 1.0 / math.sqrt(D_FF)
    w2 = jax.random.uniform(ks[11], (D_MODEL, D_FF), jnp.float32, -sf2, sf2)
    b2 = jax.random.uniform(ks[12], (D_MODEL,), jnp.float32, -sf2, sf2)

    # Random 0/1 src_mask (1 = keep); keep the diagonal so no row is fully masked.
    mask = (jax.random.uniform(ks[13], (B, S, S)) > 0.3).astype(jnp.int32)
    mask = jnp.maximum(mask, jnp.eye(S, dtype=jnp.int32)[None])

    params = (wq, wk, wv, wo, ln1_a, ln1_b, ln2_a, ln2_b, w1, b1, w2, b2)

    out = encoder_block(x, mask, params)
    out = jax.block_until_ready(out)

    ref = reference_encoder_block(x, mask, params)
    assert out.shape == (B, S, D_MODEL)
    # pl.reciprocal(approx=True) in the softmax denominator and LayerNorm has
    # ~1e-4 relative error, so compare at 2e-3 instead of 1e-4.
    assert jnp.allclose(out, ref, atol=2e-3, rtol=2e-3), "mismatch vs reference"

    print("KERNEL_OK")
</pallas_src>

<mosaic_0001>
module attributes {stable_mosaic.version = 11 : i64} {
  func.func @encoder_block_kernel(%arg0: memref<16x32xf32, #tpu.memory_space<vmem>>, %arg1: memref<16x64xf32, #tpu.memory_space<vmem>>, %arg2: memref<64x32xf32, #tpu.memory_space<vmem>>, %arg3: memref<64x64xf32, #tpu.memory_space<vmem>>, %arg4: memref<32x96xf32, #tpu.memory_space<vmem>>, %arg5: memref<32x32xf32, #tpu.memory_space<vmem>>, %arg6: memref<32x64xf32, #tpu.memory_space<vmem>>, %arg7: memref<64x32xf32, #tpu.memory_space<vmem>>, %arg8: memref<6x64xf32, #tpu.memory_space<vmem>>, %arg9: memref<16x32xf32, #tpu.memory_space<vmem>>) attributes {dimension_semantics = [], scalar_prefetch = 0 : i64, scratch_operands = 0 : i64, tpu.core_type = #tpu.core_type<tc>} {
    %c0 = arith.constant 0 : index
    %c0_0 = arith.constant 0 : index
    %0 = vector.load %arg0[%c0, %c0_0] : memref<16x32xf32, #tpu.memory_space<vmem>>, vector<16x32xf32>
    %c0_1 = arith.constant 0 : index
    %c0_2 = arith.constant 0 : index
    %1 = vector.load %arg8[%c0_1, %c0_2] : memref<6x64xf32, #tpu.memory_space<vmem>>, vector<6x64xf32>
    %2 = vector.extract_strided_slice %1 {offsets = [0, 0], sizes = [1, 32], strides = [1, 1]} : vector<6x64xf32> to vector<1x32xf32>
    %3 = vector.extract_strided_slice %1 {offsets = [1, 0], sizes = [1, 32], strides = [1, 1]} : vector<6x64xf32> to vector<1x32xf32>
    %4 = vector.extract_strided_slice %1 {offsets = [2, 0], sizes = [1, 32], strides = [1, 1]} : vector<6x64xf32> to vector<1x32xf32>
    %5 = vector.extract_strided_slice %1 {offsets = [3, 0], sizes = [1, 32], strides = [1, 1]} : vector<6x64xf32> to vector<1x32xf32>
    %6 = vector.extract_strided_slice %1 {offsets = [4, 0], sizes = [1, 64], strides = [1, 1]} : vector<6x64xf32> to vector<1x64xf32>
    %7 = vector.extract_strided_slice %1 {offsets = [5, 0], sizes = [1, 32], strides = [1, 1]} : vector<6x64xf32> to vector<1x32xf32>
    %cst = arith.constant dense<0.000000e+00> : vector<16xf32>
    %8 = vector.multi_reduction <add>, %0, %cst [1] : vector<16x32xf32> to vector<16xf32>
    %9 = vector.shape_cast %8 : vector<16xf32> to vector<16x1xf32>
    %cst_3 = arith.constant 3.200000e+01 : f32
    %10 = vector.broadcast %cst_3 : f32 to vector<16x1xf32>
    %11 = arith.divf %9, %10 : vector<16x1xf32>
    %12 = vector.broadcast %11 : vector<16x1xf32> to vector<16x32xf32>
    %13 = arith.subf %0, %12 : vector<16x32xf32>
    %14 = arith.mulf %13, %13 : vector<16x32xf32>
    %cst_4 = arith.constant dense<0.000000e+00> : vector<16xf32>
    %15 = vector.multi_reduction <add>, %14, %cst_4 [1] : vector<16x32xf32> to vector<16xf32>
    %16 = vector.shape_cast %15 : vector<16xf32> to vector<16x1xf32>
    %cst_5 = arith.constant 0.0322580636 : f32
    %17 = vector.broadcast %cst_5 : f32 to vector<16x1xf32>
    %18 = arith.mulf %16, %17 : vector<16x1xf32>
    %19 = math.sqrt %18 : vector<16x1xf32>
    %cst_6 = arith.constant 9.99999997E-7 : f32
    %20 = vector.broadcast %cst_6 : f32 to vector<16x1xf32>
    %21 = arith.addf %19, %20 : vector<16x1xf32>
    %22 = tpu.reciprocal %21 {approx = true} : vector<16x1xf32> -> vector<16x1xf32>
    %23 = vector.broadcast %22 : vector<16x1xf32> to vector<16x32xf32>
    %24 = arith.mulf %13, %23 : vector<16x32xf32>
    %25 = vector.broadcast %2 : vector<1x32xf32> to vector<16x32xf32>
    %26 = arith.mulf %25, %24 : vector<16x32xf32>
    %27 = vector.broadcast %3 : vector<1x32xf32> to vector<16x32xf32>
    %28 = arith.addf %26, %27 : vector<16x32xf32>
    %c0_7 = arith.constant 0 : index
    %c0_8 = arith.constant 0 : index
    %29 = vector.load %arg4[%c0_7, %c0_8] : memref<32x96xf32, #tpu.memory_space<vmem>>, vector<32x96xf32>
    %cst_9 = arith.constant dense<0.000000e+00> : vector<16x96xf32>
    %30 = tpu.matmul %28, %29, %cst_9 {dimension_numbers = #tpu.dot_dimension_numbers<[1], [0], [0], [1], [0, 0, 1, 1], [], []>} : vector<16x32xf32>, vector<32x96xf32>, vector<16x96xf32> -> vector<16x96xf32>
    %31 = vector.extract_strided_slice %30 {offsets = [0, 0], sizes = [16, 32], strides = [1, 1]} : vector<16x96xf32> to vector<16x32xf32>
    %32 = vector.extract_strided_slice %30 {offsets = [0, 32], sizes = [16, 32], strides = [1, 1]} : vector<16x96xf32> to vector<16x32xf32>
    %33 = vector.extract_strided_slice %30 {offsets = [0, 64], sizes = [16, 32], strides = [1, 1]} : vector<16x96xf32> to vector<16x32xf32>
    %c0_10 = arith.constant 0 : index
    %c0_11 = arith.constant 0 : index
    %34 = vector.load %arg2[%c0_10, %c0_11] : memref<64x32xf32, #tpu.memory_space<vmem>>, vector<64x32xf32>
    %35 = tpu.concatenate %32, %32, %32, %32 in 0 : vector<16x32xf32>, vector<16x32xf32>, vector<16x32xf32>, vector<16x32xf32> -> vector<64x32xf32>
    %36 = arith.mulf %35, %34 : vector<64x32xf32>
    %37 = tpu.concatenate %33, %33, %33, %33 in 0 : vector<16x32xf32>, vector<16x32xf32>, vector<16x32xf32>, vector<16x32xf32> -> vector<64x32xf32>
    %38 = arith.mulf %37, %34 : vector<64x32xf32>
    "tpu.trace_start"() <{level = 10 : i32, message = "qd,nd->qn"}> : () -> ()
    %cst_12 = arith.constant dense<0.000000e+00> : vector<16x64xf32>
    %39 = tpu.matmul %31, %36, %cst_12 {dimension_numbers = #tpu.dot_dimension_numbers<[1], [1], [0], [0], [0, 0, 1, 0], [], []>} : vector<16x32xf32>, vector<64x32xf32>, vector<16x64xf32> -> vector<16x64xf32>
    "tpu.trace_stop"() : () -> ()
    %cst_13 = arith.constant 0.353553385 : f32
    %40 = vector.broadcast %cst_13 : f32 to vector<16x64xf32>
    %41 = arith.mulf %39, %40 : vector<16x64xf32>
    %c0_14 = arith.constant 0 : index
    %c0_15 = arith.constant 0 : index
    %42 = vector.load %arg1[%c0_14, %c0_15] : memref<16x64xf32, #tpu.memory_space<vmem>>, vector<16x64xf32>
    %43 = arith.addf %41, %42 : vector<16x64xf32>
    %44 = math.exp %43 : vector<16x64xf32>
    %c0_16 = arith.constant 0 : index
    %c0_17 = arith.constant 0 : index
    %45 = vector.load %arg3[%c0_16, %c0_17] : memref<64x64xf32, #tpu.memory_space<vmem>>, vector<64x64xf32>
    %cst_18 = arith.constant dense<0.000000e+00> : vector<16x64xf32>
    %46 = tpu.matmul %44, %45, %cst_18 {dimension_numbers = #tpu.dot_dimension_numbers<[1], [0], [0], [1], [0, 0, 1, 1], [], []>} : vector<16x64xf32>, vector<64x64xf32>, vector<16x64xf32> -> vector<16x64xf32>
    %47 = tpu.reciprocal %46 {approx = true} : vector<16x64xf32> -> vector<16x64xf32>
    %48 = arith.mulf %44, %47 : vector<16x64xf32>
    %cst_19 = arith.constant dense<0.000000e+00> : vector<16x32xf32>
    %49 = tpu.matmul %48, %38, %cst_19 {dimension_numbers = #tpu.dot_dimension_numbers<[1], [0], [0], [1], [0, 0, 1, 1], [], []>} : vector<16x64xf32>, vector<64x32xf32>, vector<16x32xf32> -> vector<16x32xf32>
    %c0_20 = arith.constant 0 : index
    %c0_21 = arith.constant 0 : index
    %50 = vector.load %arg5[%c0_20, %c0_21] : memref<32x32xf32, #tpu.memory_space<vmem>>, vector<32x32xf32>
    %cst_22 = arith.constant dense<0.000000e+00> : vector<16x32xf32>
    %51 = tpu.matmul %49, %50, %cst_22 {dimension_numbers = #tpu.dot_dimension_numbers<[1], [0], [0], [1], [0, 0, 1, 1], [], []>} : vector<16x32xf32>, vector<32x32xf32>, vector<16x32xf32> -> vector<16x32xf32>
    %52 = arith.addf %0, %51 : vector<16x32xf32>
    %cst_23 = arith.constant dense<0.000000e+00> : vector<16xf32>
    %53 = vector.multi_reduction <add>, %52, %cst_23 [1] : vector<16x32xf32> to vector<16xf32>
    %54 = vector.shape_cast %53 : vector<16xf32> to vector<16x1xf32>
    %cst_24 = arith.constant 3.200000e+01 : f32
    %55 = vector.broadcast %cst_24 : f32 to vector<16x1xf32>
    %56 = arith.divf %54, %55 : vector<16x1xf32>
    %57 = vector.broadcast %56 : vector<16x1xf32> to vector<16x32xf32>
    %58 = arith.subf %52, %57 : vector<16x32xf32>
    %59 = arith.mulf %58, %58 : vector<16x32xf32>
    %cst_25 = arith.constant dense<0.000000e+00> : vector<16xf32>
    %60 = vector.multi_reduction <add>, %59, %cst_25 [1] : vector<16x32xf32> to vector<16xf32>
    %61 = vector.shape_cast %60 : vector<16xf32> to vector<16x1xf32>
    %cst_26 = arith.constant 0.0322580636 : f32
    %62 = vector.broadcast %cst_26 : f32 to vector<16x1xf32>
    %63 = arith.mulf %61, %62 : vector<16x1xf32>
    %64 = math.sqrt %63 : vector<16x1xf32>
    %cst_27 = arith.constant 9.99999997E-7 : f32
    %65 = vector.broadcast %cst_27 : f32 to vector<16x1xf32>
    %66 = arith.addf %64, %65 : vector<16x1xf32>
    %67 = tpu.reciprocal %66 {approx = true} : vector<16x1xf32> -> vector<16x1xf32>
    %68 = vector.broadcast %67 : vector<16x1xf32> to vector<16x32xf32>
    %69 = arith.mulf %58, %68 : vector<16x32xf32>
    %70 = vector.broadcast %4 : vector<1x32xf32> to vector<16x32xf32>
    %71 = arith.mulf %70, %69 : vector<16x32xf32>
    %72 = vector.broadcast %5 : vector<1x32xf32> to vector<16x32xf32>
    %73 = arith.addf %71, %72 : vector<16x32xf32>
    %c0_28 = arith.constant 0 : index
    %c0_29 = arith.constant 0 : index
    %74 = vector.load %arg6[%c0_28, %c0_29] : memref<32x64xf32, #tpu.memory_space<vmem>>, vector<32x64xf32>
    %cst_30 = arith.constant dense<0.000000e+00> : vector<16x64xf32>
    %75 = tpu.matmul %73, %74, %cst_30 {dimension_numbers = #tpu.dot_dimension_numbers<[1], [0], [0], [1], [0, 0, 1, 1], [], []>} : vector<16x32xf32>, vector<32x64xf32>, vector<16x64xf32> -> vector<16x64xf32>
    %76 = vector.broadcast %6 : vector<1x64xf32> to vector<16x64xf32>
    %77 = arith.addf %75, %76 : vector<16x64xf32>
    %cst_31 = arith.constant 0.000000e+00 : f32
    %78 = vector.broadcast %cst_31 : f32 to vector<16x64xf32>
    %79 = arith.maximumf %77, %78 : vector<16x64xf32>
    %c0_32 = arith.constant 0 : index
    %c0_33 = arith.constant 0 : index
    %80 = vector.load %arg7[%c0_32, %c0_33] : memref<64x32xf32, #tpu.memory_space<vmem>>, vector<64x32xf32>
    %cst_34 = arith.constant dense<0.000000e+00> : vector<16x32xf32>
    %81 = tpu.matmul %79, %80, %cst_34 {dimension_numbers = #tpu.dot_dimension_numbers<[1], [0], [0], [1], [0, 0, 1, 1], [], []>} : vector<16x64xf32>, vector<64x32xf32>, vector<16x32xf32> -> vector<16x32xf32>
    %82 = vector.broadcast %7 : vector<1x32xf32> to vector<16x32xf32>
    %83 = arith.addf %81, %82 : vector<16x32xf32>
    %84 = arith.addf %52, %83 : vector<16x32xf32>
    %c0_35 = arith.constant 0 : index
    %c0_36 = arith.constant 0 : index
    %85 = vector.load %arg9[%c0_35, %c0_36] : memref<16x32xf32, #tpu.memory_space<vmem>>, vector<16x32xf32>
    tpu.vector_store %arg9[%c0_35, %c0_36], %84 {strides = array<i32>} : memref<16x32xf32, #tpu.memory_space<vmem>>, vector<16x32xf32>,
    return
  }
}

</mosaic_0001>

<llo_original>
// kernel: tile.7
$region0: #{tile.7}
  %s0 = inlined_call_operand.vmem [shape: f32[16,4,16], index: 0, kind: input, shape index: {}]
  %s1 = inlined_call_operand.vmem [shape: f32[16,64], index: 1, kind: output, shape index: {}]
  $region1: #{tile.7} parent=0
    #allocation0 [shape = 'u8[65536]{0}', space=vmem, size = 0x10000, scoped, tag = 'scoped mem for input reshape']
    %s3 = sshllo.u32 0, 4
    %s4 = smul.addr 4, 15
    %s5 = scalar_lea.vmem %s0, %s4
    %v6 = vld [vmem:[%s5] sm:%s3]
    %s7 = scalar_lea.vmem [#allocation0], 120
    %8 = vst [vmem:[%s7] sm:%s3] %v6
    %s9 = smul.addr 4, 14
    %s10 = scalar_lea.vmem %s0, %s9
    %v11 = vld [vmem:[%s10] sm:%s3]
    %s12 = scalar_lea.vmem [#allocation0], 112
    %13 = vst [vmem:[%s12] sm:%s3] %v11
    %s14 = smul.addr 4, 13
    %s15 = scalar_lea.vmem %s0, %s14
    %v16 = vld [vmem:[%s15] sm:%s3]
    %s17 = scalar_lea.vmem [#allocation0], 104
    %18 = vst [vmem:[%s17] sm:%s3] %v16
    %s19 = smul.addr 4, 12
    %s20 = scalar_lea.vmem %s0, %s19
    %v21 = vld [vmem:[%s20] sm:%s3]
    %s22 = scalar_lea.vmem [#allocation0], 96
    %23 = vst [vmem:[%s22] sm:%s3] %v21
    %s24 = smul.addr 4, 11
    %s25 = scalar_lea.vmem %s0, %s24
    %v26 = vld [vmem:[%s25] sm:%s3]
    %s27 = scalar_lea.vmem [#allocation0], 88
    %28 = vst [vmem:[%s27] sm:%s3] %v26
    %s29 = smul.addr 4, 10
    %s30 = scalar_lea.vmem %s0, %s29
    %v31 = vld [vmem:[%s30] sm:%s3]
    %s32 = scalar_lea.vmem [#allocation0], 80
    %33 = vst [vmem:[%s32] sm:%s3] %v31
    %s34 = smul.addr 4, 9
    %s35 = scalar_lea.vmem %s0, %s34
    %v36 = vld [vmem:[%s35] sm:%s3]
    %s37 = scalar_lea.vmem [#allocation0], 72
    %38 = vst [vmem:[%s37] sm:%s3] %v36
    %s39 = smul.addr 4, 8
    %s40 = scalar_lea.vmem %s0, %s39
    %v41 = vld [vmem:[%s40] sm:%s3]
    %s42 = scalar_lea.vmem [#allocation0], 64
    %43 = vst [vmem:[%s42] sm:%s3] %v41
    %s44 = smul.addr 4, 7
    %s45 = scalar_lea.vmem %s0, %s44
    %v46 = vld [vmem:[%s45] sm:%s3]
    %s47 = scalar_lea.vmem [#allocation0], 56
    %48 = vst [vmem:[%s47] sm:%s3] %v46
    %s49 = smul.addr 4, 6
    %s50 = scalar_lea.vmem %s0, %s49
    %v51 = vld [vmem:[%s50] sm:%s3]
    %s52 = scalar_lea.vmem [#allocation0], 48
    %53 = vst [vmem:[%s52] sm:%s3] %v51
    %s54 = smul.addr 4, 5
    %s55 = scalar_lea.vmem %s0, %s54
    %v56 = vld [vmem:[%s55] sm:%s3]
    %s57 = scalar_lea.vmem [#allocation0], 40
    %58 = vst [vmem:[%s57] sm:%s3] %v56
    %s59 = smul.addr 4, 4
    %s60 = scalar_lea.vmem %s0, %s59
    %v61 = vld [vmem:[%s60] sm:%s3]
    %s62 = scalar_lea.vmem [#allocation0], 32
    %63 = vst [vmem:[%s62] sm:%s3] %v61
    %s64 = smul.addr 4, 3
    %s65 = scalar_lea.vmem %s0, %s64
    %v66 = vld [vmem:[%s65] sm:%s3]
    %s67 = scalar_lea.vmem [#allocation0], 24
    %68 = vst [vmem:[%s67] sm:%s3] %v66
    %s69 = smul.addr 4, 2
    %s70 = scalar_lea.vmem %s0, %s69
    %v71 = vld [vmem:[%s70] sm:%s3]
    %s72 = scalar_lea.vmem [#allocation0], 16
    %73 = vst [vmem:[%s72] sm:%s3] %v71
    %s74 = scalar_lea.vmem %s0, 4
    %v75 = vld [vmem:[%s74] sm:%s3]
    %s76 = scalar_lea.vmem [#allocation0], 8
    %77 = vst [vmem:[%s76] sm:%s3] %v75
    %v78 = vld [vmem:[%s0] sm:%s3]
    %79 = vst [vmem:[#allocation0] sm:%s3] %v78
    %v80 = vld [vmem:[#allocation0] ss:$8 sm:$0xf]
    %v81 = vld [vmem:[#allocation0] ss:$8 sm:$0xf0]
    %vm82 = vcmask 1047556
    %v83 = vsel %vm82, %v81, %v80
    %vm84 = vcmask 130048
    %85 = vst.msk [vmem:[%s1] sm:$0xff] %vm84, %v83
    %s86 = scalar_lea.vmem [#allocation0], 64
    %v87 = vld [vmem:[%s86] ss:$8 sm:$0xf]
    %s88 = scalar_lea.vmem [#allocation0], 64
    %v89 = vld [vmem:[%s88] ss:$8 sm:$0xf0]
    %vm90 = vcmask 1047556
    %v91 = vsel %vm90, %v89, %v87
    %vm92 = vcmask 130048
    %s93 = scalar_lea.vmem %s1, 8
    %94 = vst.msk [vmem:[%s93] sm:$0xff] %vm92, %v91
    %s95 = scalar_lea.vmem [#allocation0], 3
    %v96 = vld [vmem:[%s95] ss:$8 sm:$0xf]
    %s97 = scalar_lea.vmem [#allocation0], 3
    %v98 = vld [vmem:[%s97] ss:$8 sm:$0xf0]
    %vm99 = vcmask 1047556
    %v100 = vsel %vm99, %v98, %v96
    %101 = vrot.lane.b32.xlu0 %v100, 48
    %v102 = vpop.permute.xlu0 %101
    %vm103 = vcmask 523648
    %104 = vst.msk [vmem:[%s1] sm:$0xff] %vm103, %v102
    %s105 = scalar_lea.vmem [#allocation0], 67
    %v106 = vld [vmem:[%s105] ss:$8 sm:$0xf]
    %s107 = scalar_lea.vmem [#allocation0], 67
    %v108 = vld [vmem:[%s107] ss:$8 sm:$0xf0]
    %vm109 = vcmask 1047556
    %v110 = vsel %vm109, %v108, %v106
    %111 = vrot.lane.b32.xlu0 %v110, 48
    %v112 = vpop.permute.xlu0 %111
    %vm113 = vcmask 523648
    %s114 = scalar_lea.vmem %s1, 8
    %115 = vst.msk [vmem:[%s114] sm:$0xff] %vm113, %v112
    %s116 = scalar_lea.vmem [#allocation0], 2
    %v117 = vld [vmem:[%s116] ss:$8 sm:$0xf]
    %s118 = scalar_lea.vmem [#allocation0], 2
    %v119 = vld [vmem:[%s118] ss:$8 sm:$0xf0]
    %vm120 = vcmask 1047556
    %v121 = vsel %vm120, %v119, %v117
    %122 = vrot.lane.b32.xlu0 %v121, 32
    %v123 = vpop.permute.xlu0 %122
    %vm124 = vcmask 392448
    %125 = vst.msk [vmem:[%s1] sm:$0xff] %vm124, %v123
    %s126 = scalar_lea.vmem [#allocation0], 66
    %v127 = vld [vmem:[%s126] ss:$8 sm:$0xf]
    %s128 = scalar_lea.vmem [#allocation0], 66
    %v129 = vld [vmem:[%s128] ss:$8 sm:$0xf0]
    %vm130 = vcmask 1047556
    %v131 = vsel %vm130, %v129, %v127
    %132 = vrot.lane.b32.xlu0 %v131, 32
    %v133 = vpop.permute.xlu0 %132
    %vm134 = vcmask 392448
    %s135 = scalar_lea.vmem %s1, 8
    %136 = vst.msk [vmem:[%s135] sm:$0xff] %vm134, %v133
    %s137 = scalar_lea.vmem [#allocation0], 1
    %v138 = vld [vmem:[%s137] ss:$8 sm:$0xf]
    %s139 = scalar_lea.vmem [#allocation0], 1
    %v140 = vld [vmem:[%s139] ss:$8 sm:$0xf0]
    %vm141 = vcmask 1047556
    %v142 = vsel %vm141, %v140, %v138
    %143 = vrot.lane.b32.xlu0 %v142, 16
    %v144 = vpop.permute.xlu0 %143
    %vm145 = vcmask 261248
    %146 = vst.msk [vmem:[%s1] sm:$0xff] %vm145, %v144
    %s147 = scalar_lea.vmem [#allocation0], 65
    %v148 = vld [vmem:[%s147] ss:$8 sm:$0xf]
    %s149 = scalar_lea.vmem [#allocation0], 65
    %v150 = vld [vmem:[%s149] ss:$8 sm:$0xf0]
    %vm151 = vcmask 1047556
    %v152 = vsel %vm151, %v150, %v148
    %153 = vrot.lane.b32.xlu0 %v152, 16
    %v154 = vpop.permute.xlu0 %153
    %vm155 = vcmask 261248
    %s156 = scalar_lea.vmem %s1, 8
    %157 = vst.msk [vmem:[%s156] sm:$0xff] %vm155, %v154

// kernel: encoder_block.1
$region0: #{encoder_block.1}
  #allocation0 [shape = 'u32[]', space=smem, size = 0x4, offset = 0x4, fixed_abs, tag = 'smem constant byte address 0x4 - core index']
  #allocation1 [shape = 'u32[144,128]{1,0:T(1,128)}', space=vmem, size = 0x12000, scoped, tag = 'internal scratch']
  %s0 = inlined_call_operand.vmem [shape: f32[16,32], index: 0, kind: input, shape index: {}]
  %s1 = inlined_call_operand.vmem [shape: f32[16,64], index: 1, kind: input, shape index: {}]
  %s2 = inlined_call_operand.vmem [shape: f32[64,32], index: 2, kind: input, shape index: {}]
  %s3 = inlined_call_operand.vmem [shape: f32[64,64], index: 3, kind: input, shape index: {}]
  %s4 = inlined_call_operand.vmem [shape: f32[32,96], index: 4, kind: input, shape index: {}]
  %s5 = inlined_call_operand.vmem [shape: f32[32,32], index: 5, kind: input, shape index: {}]
  %s6 = inlined_call_operand.vmem [shape: f32[32,64], index: 6, kind: input, shape index: {}]
  %s7 = inlined_call_operand.vmem [shape: f32[64,32], index: 7, kind: input, shape index: {}]
  %s8 = inlined_call_operand.vmem [shape: f32[6,64], index: 8, kind: input, shape index: {}]
  %s9 = inlined_call_operand.hbm [shape: f32[16,32], index: 9, kind: output, shape index: {}]
  %s10 = sld [smem:[#allocation0]]
  $region46: #{encoder_block.1} parent=0
    _
  %s12 = ssub.s32 1, %s10
  %s13 = scalar_select 0, %s12, %s10
  $region1: #{encoder_block.1} parent=0
    #allocation2 [shape = 'u8[8192]{0}', space=vmem, size = 0x2000, scoped, tag = 'output window, operand 0, single buffered']
    #allocation3 [shape = 's32[1]{0}', space=sflag, size = 0x4, scoped, tag = 'scoped memory for encoder_block.1']
    %14 = vsyncpa [#allocation3], 0
    // Predicated region
    $region2: #{encoder_block.1} parent=1 // pred_check
      _
    $region3: #{encoder_block.1} parent=1 // pred_check_branch
      %16 = sbr.rel (0) target = $region5
    $region4: #{encoder_block.1} parent=1 // pred_region
      _
    $region5: #{encoder_block.1} parent=1 // pred_fallthru
      _
    // Predicated region
    $region6: #{encoder_block.1} parent=1 // pred_check
      _
    $region7: #{encoder_block.1} parent=1 // pred_check_branch
      %18 = sbr.rel (0) target = $region9
    $region8: #{encoder_block.1} parent=1 // pred_region
      _
    $region9: #{encoder_block.1} parent=1 // pred_fallthru
      _
    // Predicated region
    $region10: #{encoder_block.1} parent=1 // pred_check
      _
    $region11: #{encoder_block.1} parent=1 // pred_check_branch
      %20 = sbr.rel (0) target = $region13
    $region12: #{encoder_block.1} parent=1 // pred_region
      _
    $region13: #{encoder_block.1} parent=1 // pred_fallthru
      _
    // Predicated region
    $region14: #{encoder_block.1} parent=1 // pred_check
      _
    $region15: #{encoder_block.1} parent=1 // pred_check_branch
      %22 = sbr.rel (0) target = $region17
    $region16: #{encoder_block.1} parent=1 // pred_region
      _
    $region17: #{encoder_block.1} parent=1 // pred_fallthru
      _
    // Predicated region
    $region18: #{encoder_block.1} parent=1 // pred_check
      _
    $region19: #{encoder_block.1} parent=1 // pred_check_branch
      %24 = sbr.rel (0) target = $region21
    $region20: #{encoder_block.1} parent=1 // pred_region
      _
    $region21: #{encoder_block.1} parent=1 // pred_fallthru
      _
    // Predicated region
    $region22: #{encoder_block.1} parent=1 // pred_check
      _
    $region23: #{encoder_block.1} parent=1 // pred_check_branch
      %26 = sbr.rel (0) target = $region25
    $region24: #{encoder_block.1} parent=1 // pred_region
      _
    $region25: #{encoder_block.1} parent=1 // pred_fallthru
      _
    // Predicated region
    $region26: #{encoder_block.1} parent=1 // pred_check
      _
    $region27: #{encoder_block.1} parent=1 // pred_check_branch
      %28 = sbr.rel (0) target = $region29
    $region28: #{encoder_block.1} parent=1 // pred_region
      _
    $region29: #{encoder_block.1} parent=1 // pred_fallthru
      _
    // Predicated region
    $region30: #{encoder_block.1} parent=1 // pred_check
      _
    $region31: #{encoder_block.1} parent=1 // pred_check_branch
      %30 = sbr.rel (0) target = $region33
    $region32: #{encoder_block.1} parent=1 // pred_region
      _
    $region33: #{encoder_block.1} parent=1 // pred_fallthru
      _
    // Predicated region
    $region34: #{encoder_block.1} parent=1 // pred_check
      _
    $region35: #{encoder_block.1} parent=1 // pred_check_branch
      %32 = sbr.rel (0) target = $region37
    $region36: #{encoder_block.1} parent=1 // pred_region
      _
    $region37: #{encoder_block.1} parent=1 // pred_fallthru
      _
    %v33 = vld [vmem:[%s0] sm:$0xff]
    %v34 = vld [vmem:[%s0 + $0x8] sm:$0xff]
    %v35 = vld [vmem:[%s8] sm:$0x3f]
    %vm36 = vcmask 261120
    %v37 = vsel %vm36, %v33, 0.0
    %38 = vadd.xlane.f32.xlu0 %v37
    %v39 = vpop.xlane.xlu0 %38
    %v40 = vsel %vm36, %v34, 0.0
    %41 = vadd.xlane.f32.xlu0 %v40
    %v42 = vpop.xlane.xlu0 %41
    %v43 = vrcp.pop 32.0
    %v44 = vmul.f32 %v39, %v43
    %v45 = vmul.f32 %v42, %v43
    %v46 = vsub.f32 %v33, %v44
    %v47 = vsub.f32 %v34, %v45
    %v48 = vmul.f32 %v46, %v46
    %v49 = vmul.f32 %v47, %v47
    %v50 = vsel %vm36, %v48, 0.0
    %51 = vadd.xlane.f32.xlu0 %v50
    %v52 = vpop.xlane.xlu0 %51
    %v53 = vsel %vm36, %v49, 0.0
    %54 = vadd.xlane.f32.xlu0 %v53
    %v55 = vpop.xlane.xlu0 %54
    %v56 = vmul.f32 %v52, 0.032258064
    %v57 = vmul.f32 %v55, 0.032258064
    %v58 = vrsqrt.pop %v56
    %v59 = vmul.f32 %v56, %v58
    %vm60 = vcmp.eq.f32.partialorder %v56, inf
    %v61 = vsel %vm60, %v56, %v59
    %vm62 = vcmp.eq.f32.partialorder %v56, 0.0
    %v63 = vand.u32 %v56, 2147483648
    %v64 = vsel %vm62, %v63, %v61
    %v65 = vrsqrt.pop %v57
    %v66 = vmul.f32 %v57, %v65
    %vm67 = vcmp.eq.f32.partialorder %v57, inf
    %v68 = vsel %vm67, %v57, %v66
    %vm69 = vcmp.eq.f32.partialorder %v57, 0.0
    %v70 = vand.u32 %v57, 2147483648
    %v71 = vsel %vm69, %v70, %v68
    %v72 = vadd.f32 %v64, 1e-06
    %v73 = vadd.f32 %v71, 1e-06
    %v74 = vrcp.pop %v72
    %v75 = vrcp.pop %v73
    %v76 = vmul.f32 %v46, %v74
    %v77 = vmul.f32 %v47, %v75
    %v78 = vlaneseq
    %v79 = vshrl.u32 %v78, 7
    %v80 = vsub.s32 0, %v79
    %v81 = vrot.slane %v35, %v80
    %v82 = vmul.f32 %v81, %v76
    %v83 = vmul.f32 %v81, %v77
    %v84 = vlaneseq
    %v85 = vshrl.u32 %v84, 7
    %v86 = vsub.s32 1, %v85
    %v87 = vrot.slane %v35, %v86
    %v88 = vadd.f32 %v82, %v87
    %v89 = vadd.f32 %v83, %v87
    %v90 = vld [vmem:[%s4] sm:$0xff]
    %v91 = vld [vmem:[%s4 + $0x8] sm:$0xff]
    %v92 = vld [vmem:[%s4 + $0x10] sm:$0xff]
    %v93 = vld [vmem:[%s4 + $0x18] sm:$0xff]
    %v95 = vsel %vm36, %v88, 0
    %v98 = vsel %vm36, %v89, 0
    %100 = vmatprep.subr.mxu0 0.0
    %101 = vmatpush1.msra.mxu0 %v90
    %102 = vmatprep.subr.mxu0 0.0
    %103 = vmatpush1.msra.mxu0 %v91
    %104 = vmatprep.subr.mxu0 0.0
    %105 = vmatpush1.msra.mxu0 %v92
    %106 = vmatprep.subr.mxu0 0.0
    %107 = vmatpush1.msra.mxu0 %v93
    %108 = vmatprep.subr.mxu0 0.0
    %109 = vmatpush1.msra.mxu0 0.0
    %110 = vmatprep.subr.mxu0 0.0
    %111 = vmatpush1.msra.mxu0 0.0
    %112 = vmatprep.subr.mxu0 0.0
    %113 = vmatpush1.msra.mxu0 0.0
    %114 = vmatprep.subr.mxu0 0.0
    %115 = vmatpush1.msra.mxu0 0.0
    %116 = vmatprep.subr.mxu0 0.0
    %117 = vmatpush1.msra.mxu0 0.0
    %118 = vmatprep.subr.mxu0 0.0
    %119 = vmatpush1.msra.mxu0 0.0
    %120 = vmatprep.subr.mxu0 0.0
    %121 = vmatpush1.msra.mxu0 0.0
    %122 = vmatprep.subr.mxu0 0.0
    %123 = vmatpush1.msra.mxu0 0.0
    %124 = vmatprep.subr.mxu0 0.0
    %125 = vmatpush1.msra.mxu0 0.0
    %126 = vmatprep.subr.mxu0 0.0
    %127 = vmatpush1.msra.mxu0 0.0
    %128 = vmatprep.subr.mxu0 0.0
    %129 = vmatpush1.msra.mxu0 0.0
    %130 = vmatprep.subr.mxu0 0.0
    %131 = vmatpush1.msra.mxu0 0.0
    %132 = vmatprep.subr.mxu0 0.0
    %133 = vmatpush1.msra.mxu0 0.0
    %134 = vmatprep.subr.mxu0 0.0
    %135 = vmatpush1.msra.mxu0 0.0
    %136 = vmatprep.subr.mxu0 0.0
    %137 = vmatpush1.msra.mxu0 0.0
    %138 = vmatprep.subr.mxu0 0.0
    %139 = vmatpush1.msra.mxu0 0.0
    %140 = vmatprep.subr.mxu0 0.0
    %141 = vmatpush1.msra.mxu0 0.0
    %142 = vmatprep.subr.mxu0 0.0
    %143 = vmatpush1.msra.mxu0 0.0
    %144 = vmatprep.subr.mxu0 0.0
    %145 = vmatpush1.msra.mxu0 0.0
    %146 = vmatprep.subr.mxu0 0.0
    %147 = vmatpush1.msra.mxu0 0.0
    %148 = vmatprep.subr.mxu0 0.0
    %149 = vmatpush1.msra.mxu0 0.0
    %150 = vmatprep.subr.mxu0 0.0
    %151 = vmatpush1.msra.mxu0 0.0
    %152 = vmatprep.subr.mxu0 0.0
    %153 = vmatpush1.msra.mxu0 0.0
    %154 = vmatprep.subr.mxu0 0.0
    %155 = vmatpush1.msra.mxu0 0.0
    %156 = vmatprep.subr.mxu0 0.0
    %157 = vmatpush1.msra.mxu0 0.0
    %158 = vmatprep.subr.mxu0 0.0
    %159 = vmatpush1.msra.mxu0 0.0
    %160 = vmatprep.subr.mxu0 0.0
    %161 = vmatpush1.msra.mxu0 0.0
    %162 = vmatprep.subr.mxu0 0.0
    %163 = vmatpush1.msra.mxu0 0.0
    %164 = vmatprep.mubr.f32.mxu0 0.0
    %165 = vmatmul.mubr.f32.gmra.mrb[0].mxu0 %v95
    %v166 = vpop.f32.mrb[0].mxu0
    %v167 = vadd.f32 0.0, %v166
    %v168 = vpop.f32.mrb[0].mxu0
    %169 = vmatprep.mubr.f32.mxu0 0.0
    %170 = vmatmul.mubr.f32.gmra.mrb[0].mxu0 %v98
    %v171 = vpop.f32.mrb[0].mxu0
    %v172 = vadd.f32 0.0, %v171
    %v173 = vpop.f32.mrb[0].mxu0
    %174 = vdwg.mxu0
    %v175 = vld [vmem:[%s2] sm:$0xff]
    %v176 = vld [vmem:[%s2 + $0x8] sm:$0xff]
    %v177 = vld [vmem:[%s2 + $0x10] sm:$0xff]
    %v178 = vld [vmem:[%s2 + $0x18] sm:$0xff]
    %v179 = vld [vmem:[%s2 + $0x20] sm:$0xff]
    %v180 = vld [vmem:[%s2 + $0x28] sm:$0xff]
    %v181 = vld [vmem:[%s2 + $0x30] sm:$0xff]
    %v182 = vld [vmem:[%s2 + $0x38] sm:$0xff]
    %191 = vrot.lane.b32.xlu0 %v175, 32
    %v192 = vpop.permute.xlu0 %191
    %193 = vrot.lane.b32.xlu0 %v176, 32
    %v194 = vpop.permute.xlu0 %193
    %195 = vrot.lane.b32.xlu0 %v177, 32
    %v196 = vpop.permute.xlu0 %195
    %197 = vrot.lane.b32.xlu0 %v178, 32
    %v198 = vpop.permute.xlu0 %197
    %199 = vrot.lane.b32.xlu0 %v179, 32
    %v200 = vpop.permute.xlu0 %199
    %201 = vrot.lane.b32.xlu0 %v180, 32
    %v202 = vpop.permute.xlu0 %201
    %203 = vrot.lane.b32.xlu0 %v181, 32
    %v204 = vpop.permute.xlu0 %203
    %205 = vrot.lane.b32.xlu0 %v182, 32
    %v206 = vpop.permute.xlu0 %205
    %v215 = vmul.f32 %v167, %v192
    %v216 = vmul.f32 %v172, %v194
    %v217 = vmul.f32 %v167, %v196
    %v218 = vmul.f32 %v172, %v198
    %v219 = vmul.f32 %v167, %v200
    %v220 = vmul.f32 %v172, %v202
    %v221 = vmul.f32 %v167, %v204
    %v222 = vmul.f32 %v172, %v206
    %223 = vrot.lane.b32.xlu0 %v175, 64
    %v224 = vpop.permute.xlu0 %223
    %225 = vrot.lane.b32.xlu0 %v176, 64
    %v226 = vpop.permute.xlu0 %225
    %227 = vrot.lane.b32.xlu0 %v177, 64
    %v228 = vpop.permute.xlu0 %227
    %229 = vrot.lane.b32.xlu0 %v178, 64
    %v230 = vpop.permute.xlu0 %229
    %231 = vrot.lane.b32.xlu0 %v179, 64
    %v232 = vpop.permute.xlu0 %231
    %233 = vrot.lane.b32.xlu0 %v180, 64
    %v234 = vpop.permute.xlu0 %233
    %235 = vrot.lane.b32.xlu0 %v181, 64
    %v236 = vpop.permute.xlu0 %235
    %237 = vrot.lane.b32.xlu0 %v182, 64
    %v238 = vpop.permute.xlu0 %237
    %v247 = vmul.f32 %v167, %v224
    %v248 = vmul.f32 %v172, %v226
    %v249 = vmul.f32 %v167, %v228
    %v250 = vmul.f32 %v172, %v230
    %v251 = vmul.f32 %v167, %v232
    %v252 = vmul.f32 %v172, %v234
    %v253 = vmul.f32 %v167, %v236
    %v254 = vmul.f32 %v172, %v238
    %263 = vrot.lane.b32.xlu0 %v215, 96
    %v264 = vpop.permute.xlu0 %263
    %265 = vrot.lane.b32.xlu0 %v216, 96
    %v266 = vpop.permute.xlu0 %265
    %267 = vrot.lane.b32.xlu0 %v217, 96
    %v268 = vpop.permute.xlu0 %267
    %269 = vrot.lane.b32.xlu0 %v218, 96
    %v270 = vpop.permute.xlu0 %269
    %271 = vrot.lane.b32.xlu0 %v219, 96
    %v272 = vpop.permute.xlu0 %271
    %273 = vrot.lane.b32.xlu0 %v220, 96
    %v274 = vpop.permute.xlu0 %273
    %275 = vrot.lane.b32.xlu0 %v221, 96
    %v276 = vpop.permute.xlu0 %275
    %277 = vrot.lane.b32.xlu0 %v222, 96
    %v278 = vpop.permute.xlu0 %277
    %v280 = vsel %vm36, %v167, 0
    %v283 = vsel %vm36, %v172, 0
    %v285 = vsel %vm36, %v264, 0
    %v287 = vsel %vm36, %v266, 0
    %v289 = vsel %vm36, %v268, 0
    %v291 = vsel %vm36, %v270, 0
    %v293 = vsel %vm36, %v272, 0
    %v295 = vsel %vm36, %v274, 0
    %v297 = vsel %vm36, %v276, 0
    %v299 = vsel %vm36, %v278, 0
    %301 = vmatprep.subr.mxu0 0.0
    %302 = vmatpush1.xpose.msra.mxu0 %v285
    %303 = vmatprep.subr.mxu0 0.0
    %304 = vmatpush1.xpose.msra.mxu0 %v287
    %305 = vmatprep.subr.mxu0 0.0
    %306 = vmatpush1.xpose.msra.mxu0 %v289
    %307 = vmatprep.subr.mxu0 0.0
    %308 = vmatpush1.xpose.msra.mxu0 %v291
    %309 = vmatprep.subr.mxu0 0.0
    %310 = vmatpush1.xpose.msra.mxu0 %v293
    %311 = vmatprep.subr.mxu0 0.0
    %312 = vmatpush1.xpose.msra.mxu0 %v295
    %313 = vmatprep.subr.mxu0 0.0
    %314 = vmatpush1.xpose.msra.mxu0 %v297
    %315 = vmatprep.subr.mxu0 0.0
    %316 = vmatpush1.xpose.msra.mxu0 %v299
    %317 = vmatprep.subr.mxu0 0.0
    %318 = vmatpush1.xpose.msra.mxu0 0.0
    %319 = vmatprep.subr.mxu0 0.0
    %320 = vmatpush1.xpose.msra.mxu0 0.0
    %321 = vmatprep.subr.mxu0 0.0
    %322 = vmatpush1.xpose.msra.mxu0 0.0
    %323 = vmatprep.subr.mxu0 0.0
    %324 = vmatpush1.xpose.msra.mxu0 0.0
    %325 = vmatprep.subr.mxu0 0.0
    %326 = vmatpush1.xpose.msra.mxu0 0.0
    %327 = vmatprep.subr.mxu0 0.0
    %328 = vmatpush1.xpose.msra.mxu0 0.0
    %329 = vmatprep.subr.mxu0 0.0
    %330 = vmatpush1.xpose.msra.mxu0 0.0
    %331 = vmatprep.subr.mxu0 0.0
    %332 = vmatpush1.xpose.msra.mxu0 0.0
    %333 = vmatprep.subr.mxu0 0.0
    %334 = vmatpush1.xpose.msra.mxu0 0.0
    %335 = vmatprep.subr.mxu0 0.0
    %336 = vmatpush1.xpose.msra.mxu0 0.0
    %337 = vmatprep.subr.mxu0 0.0
    %338 = vmatpush1.xpose.msra.mxu0 0.0
    %339 = vmatprep.subr.mxu0 0.0
    %340 = vmatpush1.xpose.msra.mxu0 0.0
    %341 = vmatprep.subr.mxu0 0.0
    %342 = vmatpush1.xpose.msra.mxu0 0.0
    %343 = vmatprep.subr.mxu0 0.0
    %344 = vmatpush1.xpose.msra.mxu0 0.0
    %345 = vmatprep.subr.mxu0 0.0
    %346 = vmatpush1.xpose.msra.mxu0 0.0
    %347 = vmatprep.subr.mxu0 0.0
    %348 = vmatpush1.xpose.msra.mxu0 0.0
    %349 = vmatprep.subr.mxu0 0.0
    %350 = vmatpush1.xpose.msra.mxu0 0.0
    %351 = vmatprep.subr.mxu0 0.0
    %352 = vmatpush1.xpose.msra.mxu0 0.0
    %353 = vmatprep.subr.mxu0 0.0
    %354 = vmatpush1.xpose.msra.mxu0 0.0
    %355 = vmatprep.subr.mxu0 0.0
    %356 = vmatpush1.xpose.msra.mxu0 0.0
    %357 = vmatprep.subr.mxu0 0.0
    %358 = vmatpush1.xpose.msra.mxu0 0.0
    %359 = vmatprep.subr.mxu0 0.0
    %360 = vmatpush1.xpose.msra.mxu0 0.0
    %361 = vmatprep.subr.mxu0 0.0
    %362 = vmatpush1.xpose.msra.mxu0 0.0
    %363 = vmatprep.subr.mxu0 0.0
    %364 = vmatpush1.xpose.msra.mxu0 0.0
    %365 = vmatprep.mubr.f32.mxu0 0.0
    %366 = vmatmul.mubr.f32.gmra.mrb[0].mxu0 %v280
    %v367 = vpop.f32.mrb[0].mxu0
    %v368 = vadd.f32 0.0, %v367
    %v369 = vpop.f32.mrb[0].mxu0
    %370 = vmatprep.mubr.f32.mxu0 0.0
    %371 = vmatmul.mubr.f32.gmra.mrb[0].mxu0 %v283
    %v372 = vpop.f32.mrb[0].mxu0
    %v373 = vadd.f32 0.0, %v372
    %v374 = vpop.f32.mrb[0].mxu0
    %375 = vdwg.mxu0
    %v376 = vmul.f32 %v368, 0.35355338
    %v377 = vmul.f32 %v373, 0.35355338
    %v378 = vld [vmem:[%s1] sm:$0xff]
    %v379 = vld [vmem:[%s1 + $0x8] sm:$0xff]
    %v380 = vadd.f32 %v376, %v378
    %v381 = vadd.f32 %v377, %v379
    %v382 = vmul.f32 %v380, 1.442695
    %v383 = vpow.pop %v382
    %v384 = vmul.f32 %v381, 1.442695
    %v385 = vpow.pop %v384
    %v386 = vld [vmem:[%s3] sm:$0xff]
    %v387 = vld [vmem:[%s3 + $0x8] sm:$0xff]
    %v388 = vld [vmem:[%s3 + $0x10] sm:$0xff]
    %v389 = vld [vmem:[%s3 + $0x18] sm:$0xff]
    %v390 = vld [vmem:[%s3 + $0x20] sm:$0xff]
    %v391 = vld [vmem:[%s3 + $0x28] sm:$0xff]
    %v392 = vld [vmem:[%s3 + $0x30] sm:$0xff]
    %v393 = vld [vmem:[%s3 + $0x38] sm:$0xff]
    %vm394 = vcmask 523264
    %v396 = vsel %vm394, %v383, 0
    %v399 = vsel %vm394, %v385, 0
    %401 = vmatprep.subr.mxu0 0.0
    %402 = vmatpush1.msra.mxu0 %v386
    %403 = vmatprep.subr.mxu0 0.0
    %404 = vmatpush1.msra.mxu0 %v387
    %405 = vmatprep.subr.mxu0 0.0
    %406 = vmatpush1.msra.mxu0 %v388
    %407 = vmatprep.subr.mxu0 0.0
    %408 = vmatpush1.msra.mxu0 %v389
    %409 = vmatprep.subr.mxu0 0.0
    %410 = vmatpush1.msra.mxu0 %v390
    %411 = vmatprep.subr.mxu0 0.0
    %412 = vmatpush1.msra.mxu0 %v391
    %413 = vmatprep.subr.mxu0 0.0
    %414 = vmatpush1.msra.mxu0 %v392
    %415 = vmatprep.subr.mxu0 0.0
    %416 = vmatpush1.msra.mxu0 %v393
    %417 = vmatprep.subr.mxu0 0.0
    %418 = vmatpush1.msra.mxu0 0.0
    %419 = vmatprep.subr.mxu0 0.0
    %420 = vmatpush1.msra.mxu0 0.0
    %421 = vmatprep.subr.mxu0 0.0
    %422 = vmatpush1.msra.mxu0 0.0
    %423 = vmatprep.subr.mxu0 0.0
    %424 = vmatpush1.msra.mxu0 0.0
    %425 = vmatprep.subr.mxu0 0.0
    %426 = vmatpush1.msra.mxu0 0.0
    %427 = vmatprep.subr.mxu0 0.0
    %428 = vmatpush1.msra.mxu0 0.0
    %429 = vmatprep.subr.mxu0 0.0
    %430 = vmatpush1.msra.mxu0 0.0
    %431 = vmatprep.subr.mxu0 0.0
    %432 = vmatpush1.msra.mxu0 0.0
    %433 = vmatprep.subr.mxu0 0.0
    %434 = vmatpush1.msra.mxu0 0.0
    %435 = vmatprep.subr.mxu0 0.0
    %436 = vmatpush1.msra.mxu0 0.0
    %437 = vmatprep.subr.mxu0 0.0
    %438 = vmatpush1.msra.mxu0 0.0
    %439 = vmatprep.subr.mxu0 0.0
    %440 = vmatpush1.msra.mxu0 0.0
    %441 = vmatprep.subr.mxu0 0.0
    %442 = vmatpush1.msra.mxu0 0.0
    %443 = vmatprep.subr.mxu0 0.0
    %444 = vmatpush1.msra.mxu0 0.0
    %445 = vmatprep.subr.mxu0 0.0
    %446 = vmatpush1.msra.mxu0 0.0
    %447 = vmatprep.subr.mxu0 0.0
    %448 = vmatpush1.msra.mxu0 0.0
    %449 = vmatprep.subr.mxu0 0.0
    %450 = vmatpush1.msra.mxu0 0.0
    %451 = vmatprep.subr.mxu0 0.0
    %452 = vmatpush1.msra.mxu0 0.0
    %453 = vmatprep.subr.mxu0 0.0
    %454 = vmatpush1.msra.mxu0 0.0
    %455 = vmatprep.subr.mxu0 0.0
    %456 = vmatpush1.msra.mxu0 0.0
    %457 = vmatprep.subr.mxu0 0.0
    %458 = vmatpush1.msra.mxu0 0.0
    %459 = vmatprep.subr.mxu0 0.0
    %460 = vmatpush1.msra.mxu0 0.0
    %461 = vmatprep.subr.mxu0 0.0
    %462 = vmatpush1.msra.mxu0 0.0
    %463 = vmatprep.subr.mxu0 0.0
    %464 = vmatpush1.msra.mxu0 0.0
    %465 = vmatprep.mubr.f32.mxu0 0.0
    %466 = vmatmul.mubr.f32.gmra.mrb[0].mxu0 %v396
    %v467 = vpop.f32.mrb[0].mxu0
    %v468 = vadd.f32 0.0, %v467
    %v469 = vpop.f32.mrb[0].mxu0
    %470 = vmatprep.mubr.f32.mxu0 0.0
    %471 = vmatmul.mubr.f32.gmra.mrb[0].mxu0 %v399
    %v472 = vpop.f32.mrb[0].mxu0
    %v473 = vadd.f32 0.0, %v472
    %v474 = vpop.f32.mrb[0].mxu0
    %475 = vdwg.mxu0
    %v476 = vrcp.pop %v468
    %v477 = vrcp.pop %v473
    %v478 = vmul.f32 %v383, %v476
    %v479 = vmul.f32 %v385, %v477
    %488 = vrot.lane.b32.xlu0 %v247, 64
    %v489 = vpop.permute.xlu0 %488
    %490 = vrot.lane.b32.xlu0 %v248, 64
    %v491 = vpop.permute.xlu0 %490
    %492 = vrot.lane.b32.xlu0 %v249, 64
    %v493 = vpop.permute.xlu0 %492
    %494 = vrot.lane.b32.xlu0 %v250, 64
    %v495 = vpop.permute.xlu0 %494
    %496 = vrot.lane.b32.xlu0 %v251, 64
    %v497 = vpop.permute.xlu0 %496
    %498 = vrot.lane.b32.xlu0 %v252, 64
    %v499 = vpop.permute.xlu0 %498
    %500 = vrot.lane.b32.xlu0 %v253, 64
    %v501 = vpop.permute.xlu0 %500
    %502 = vrot.lane.b32.xlu0 %v254, 64
    %v503 = vpop.permute.xlu0 %502
    %v513 = vsel %vm394, %v478, 0
    %v516 = vsel %vm394, %v479, 0
    %518 = vmatprep.subr.mxu0 0.0
    %519 = vmatpush1.msra.mxu0 %v489
    %520 = vmatprep.subr.mxu0 0.0
    %521 = vmatpush1.msra.mxu0 %v491
    %522 = vmatprep.subr.mxu0 0.0
    %523 = vmatpush1.msra.mxu0 %v493
    %524 = vmatprep.subr.mxu0 0.0
    %525 = vmatpush1.msra.mxu0 %v495
    %526 = vmatprep.subr.mxu0 0.0
    %527 = vmatpush1.msra.mxu0 %v497
    %528 = vmatprep.subr.mxu0 0.0
    %529 = vmatpush1.msra.mxu0 %v499
    %530 = vmatprep.subr.mxu0 0.0
    %531 = vmatpush1.msra.mxu0 %v501
    %532 = vmatprep.subr.mxu0 0.0
    %533 = vmatpush1.msra.mxu0 %v503
    %534 = vmatprep.subr.mxu0 0.0
    %535 = vmatpush1.msra.mxu0 0.0
    %536 = vmatprep.subr.mxu0 0.0
    %537 = vmatpush1.msra.mxu0 0.0
    %538 = vmatprep.subr.mxu0 0.0
    %539 = vmatpush1.msra.mxu0 0.0
    %540 = vmatprep.subr.mxu0 0.0
    %541 = vmatpush1.msra.mxu0 0.0
    %542 = vmatprep.subr.mxu0 0.0
    %543 = vmatpush1.msra.mxu0 0.0
    %544 = vmatprep.subr.mxu0 0.0
    %545 = vmatpush1.msra.mxu0 0.0
    %546 = vmatprep.subr.mxu0 0.0
    %547 = vmatpush1.msra.mxu0 0.0
    %548 = vmatprep.subr.mxu0 0.0
    %549 = vmatpush1.msra.mxu0 0.0
    %550 = vmatprep.subr.mxu0 0.0
    %551 = vmatpush1.msra.mxu0 0.0
    %552 = vmatprep.subr.mxu0 0.0
    %553 = vmatpush1.msra.mxu0 0.0
    %554 = vmatprep.subr.mxu0 0.0
    %555 = vmatpush1.msra.mxu0 0.0
    %556 = vmatprep.subr.mxu0 0.0
    %557 = vmatpush1.msra.mxu0 0.0
    %558 = vmatprep.subr.mxu0 0.0
    %559 = vmatpush1.msra.mxu0 0.0
    %560 = vmatprep.subr.mxu0 0.0
    %561 = vmatpush1.msra.mxu0 0.0
    %562 = vmatprep.subr.mxu0 0.0
    %563 = vmatpush1.msra.mxu0 0.0
    %564 = vmatprep.subr.mxu0 0.0
    %565 = vmatpush1.msra.mxu0 0.0
    %566 = vmatprep.subr.mxu0 0.0
    %567 = vmatpush1.msra.mxu0 0.0
    %568 = vmatprep.subr.mxu0 0.0
    %569 = vmatpush1.msra.mxu0 0.0
    %570 = vmatprep.subr.mxu0 0.0
    %571 = vmatpush1.msra.mxu0 0.0
    %572 = vmatprep.subr.mxu0 0.0
    %573 = vmatpush1.msra.mxu0 0.0
    %574 = vmatprep.subr.mxu0 0.0
    %575 = vmatpush1.msra.mxu0 0.0
    %576 = vmatprep.subr.mxu0 0.0
    %577 = vmatpush1.msra.mxu0 0.0
    %578 = vmatprep.subr.mxu0 0.0
    %579 = vmatpush1.msra.mxu0 0.0
    %580 = vmatprep.subr.mxu0 0.0
    %581 = vmatpush1.msra.mxu0 0.0
    %582 = vmatprep.mubr.f32.mxu0 0.0
    %583 = vmatmul.mubr.f32.gmra.mrb[0].mxu0 %v513
    %v584 = vpop.f32.mrb[0].mxu0
    %v585 = vadd.f32 0.0, %v584
    %v586 = vpop.f32.mrb[0].mxu0
    %587 = vmatprep.mubr.f32.mxu0 0.0
    %588 = vmatmul.mubr.f32.gmra.mrb[0].mxu0 %v516
    %v589 = vpop.f32.mrb[0].mxu0
    %v590 = vadd.f32 0.0, %v589
    %v591 = vpop.f32.mrb[0].mxu0
    %592 = vdwg.mxu0
    %v593 = vld [vmem:[%s5] sm:$0xff]
    %v594 = vld [vmem:[%s5 + $0x8] sm:$0xff]
    %v595 = vld [vmem:[%s5 + $0x10] sm:$0xff]
    %v596 = vld [vmem:[%s5 + $0x18] sm:$0xff]
    %v598 = vsel %vm36, %v585, 0
    %v601 = vsel %vm36, %v590, 0
    %603 = vmatprep.subr.mxu0 0.0
    %604 = vmatpush1.msra.mxu0 %v593
    %605 = vmatprep.subr.mxu0 0.0
    %606 = vmatpush1.msra.mxu0 %v594
    %607 = vmatprep.subr.mxu0 0.0
    %608 = vmatpush1.msra.mxu0 %v595
    %609 = vmatprep.subr.mxu0 0.0
    %610 = vmatpush1.msra.mxu0 %v596
    %611 = vmatprep.subr.mxu0 0.0
    %612 = vmatpush1.msra.mxu0 0.0
    %613 = vmatprep.subr.mxu0 0.0
    %614 = vmatpush1.msra.mxu0 0.0
    %615 = vmatprep.subr.mxu0 0.0
    %616 = vmatpush1.msra.mxu0 0.0
    %617 = vmatprep.subr.mxu0 0.0
    %618 = vmatpush1.msra.mxu0 0.0
    %619 = vmatprep.subr.mxu0 0.0
    %620 = vmatpush1.msra.mxu0 0.0
    %621 = vmatprep.subr.mxu0 0.0
    %622 = vmatpush1.msra.mxu0 0.0
    %623 = vmatprep.subr.mxu0 0.0
    %624 = vmatpush1.msra.mxu0 0.0
    %625 = vmatprep.subr.mxu0 0.0
    %626 = vmatpush1.msra.mxu0 0.0
    %627 = vmatprep.subr.mxu0 0.0
    %628 = vmatpush1.msra.mxu0 0.0
    %629 = vmatprep.subr.mxu0 0.0
    %630 = vmatpush1.msra.mxu0 0.0
    %631 = vmatprep.subr.mxu0 0.0
    %632 = vmatpush1.msra.mxu0 0.0
    %633 = vmatprep.subr.mxu0 0.0
    %634 = vmatpush1.msra.mxu0 0.0
    %635 = vmatprep.subr.mxu0 0.0
    %636 = vmatpush1.msra.mxu0 0.0
    %637 = vmatprep.subr.mxu0 0.0
    %638 = vmatpush1.msra.mxu0 0.0
    %639 = vmatprep.subr.mxu0 0.0
    %640 = vmatpush1.msra.mxu0 0.0
    %641 = vmatprep.subr.mxu0 0.0
    %642 = vmatpush1.msra.mxu0 0.0
    %643 = vmatprep.subr.mxu0 0.0
    %644 = vmatpush1.msra.mxu0 0.0
    %645 = vmatprep.subr.mxu0 0.0
    %646 = vmatpush1.msra.mxu0 0.0
    %647 = vmatprep.subr.mxu0 0.0
    %648 = vmatpush1.msra.mxu0 0.0
    %649 = vmatprep.subr.mxu0 0.0
    %650 = vmatpush1.msra.mxu0 0.0
    %651 = vmatprep.subr.mxu0 0.0
    %652 = vmatpush1.msra.mxu0 0.0
    %653 = vmatprep.subr.mxu0 0.0
    %654 = vmatpush1.msra.mxu0 0.0
    %655 = vmatprep.subr.mxu0 0.0
    %656 = vmatpush1.msra.mxu0 0.0
    %657 = vmatprep.subr.mxu0 0.0
    %658 = vmatpush1.msra.mxu0 0.0
    %659 = vmatprep.subr.mxu0 0.0
    %660 = vmatpush1.msra.mxu0 0.0
    %661 = vmatprep.subr.mxu0 0.0
    %662 = vmatpush1.msra.mxu0 0.0
    %663 = vmatprep.subr.mxu0 0.0
    %664 = vmatpush1.msra.mxu0 0.0
    %665 = vmatprep.subr.mxu0 0.0
    %666 = vmatpush1.msra.mxu0 0.0
    %667 = vmatprep.mubr.f32.mxu0 0.0
    %668 = vmatmul.mubr.f32.gmra.mrb[0].mxu0 %v598
    %v669 = vpop.f32.mrb[0].mxu0
    %v670 = vadd.f32 0.0, %v669
    %v671 = vpop.f32.mrb[0].mxu0
    %672 = vmatprep.mubr.f32.mxu0 0.0
    %673 = vmatmul.mubr.f32.gmra.mrb[0].mxu0 %v601
    %v674 = vpop.f32.mrb[0].mxu0
    %v675 = vadd.f32 0.0, %v674
    %v676 = vpop.f32.mrb[0].mxu0
    %677 = vdwg.mxu0
    %v678 = vadd.f32 %v33, %v670
    %v679 = vadd.f32 %v34, %v675
    %v680 = vsel %vm36, %v678, 0.0
    %681 = vadd.xlane.f32.xlu0 %v680
    %v682 = vpop.xlane.xlu0 %681
    %v683 = vsel %vm36, %v679, 0.0
    %684 = vadd.xlane.f32.xlu0 %v683
    %v685 = vpop.xlane.xlu0 %684
    %v686 = vmul.f32 %v682, %v43
    %v687 = vmul.f32 %v685, %v43
    %v688 = vsub.f32 %v678, %v686
    %v689 = vsub.f32 %v679, %v687
    %v690 = vmul.f32 %v688, %v688
    %v691 = vmul.f32 %v689, %v689
    %v692 = vsel %vm36, %v690, 0.0
    %693 = vadd.xlane.f32.xlu0 %v692
    %v694 = vpop.xlane.xlu0 %693
    %v695 = vsel %vm36, %v691, 0.0
    %696 = vadd.xlane.f32.xlu0 %v695
    %v697 = vpop.xlane.xlu0 %696
    %v698 = vmul.f32 %v694, 0.032258064
    %v699 = vmul.f32 %v697, 0.032258064
    %v700 = vrsqrt.pop %v698
    %v701 = vmul.f32 %v698, %v700
    %vm702 = vcmp.eq.f32.partialorder %v698, inf
    %v703 = vsel %vm702, %v698, %v701
    %vm704 = vcmp.eq.f32.partialorder %v698, 0.0
    %v705 = vand.u32 %v698, 2147483648
    %v706 = vsel %vm704, %v705, %v703
    %v707 = vrsqrt.pop %v699
    %v708 = vmul.f32 %v699, %v707
    %vm709 = vcmp.eq.f32.partialorder %v699, inf
    %v710 = vsel %vm709, %v699, %v708
    %vm711 = vcmp.eq.f32.partialorder %v699, 0.0
    %v712 = vand.u32 %v699, 2147483648
    %v713 = vsel %vm711, %v712, %v710
    %v714 = vadd.f32 %v706, 1e-06
    %v715 = vadd.f32 %v713, 1e-06
    %v716 = vrcp.pop %v714
    %v717 = vrcp.pop %v715
    %v718 = vmul.f32 %v688, %v716
    %v719 = vmul.f32 %v689, %v717
    %v720 = vlaneseq
    %v721 = vshrl.u32 %v720, 7
    %v722 = vsub.s32 2, %v721
    %v723 = vrot.slane %v35, %v722
    %v724 = vmul.f32 %v723, %v718
    %v725 = vmul.f32 %v723, %v719
    %v726 = vlaneseq
    %v727 = vshrl.u32 %v726, 7
    %v728 = vsub.s32 3, %v727
    %v729 = vrot.slane %v35, %v728
    %v730 = vadd.f32 %v724, %v729
    %v731 = vadd.f32 %v725, %v729
    %v732 = vld [vmem:[%s6] sm:$0xff]
    %v733 = vld [vmem:[%s6 + $0x8] sm:$0xff]
    %v734 = vld [vmem:[%s6 + $0x10] sm:$0xff]
    %v735 = vld [vmem:[%s6 + $0x18] sm:$0xff]
    %v736 = vlaneseq
    %v737 = vshrl.u32 %v736, 7
    %v738 = vsub.s32 4, %v737
    %v739 = vrot.slane %v35, %v738
    %v741 = vsel %vm36, %v730, 0
    %v744 = vsel %vm36, %v731, 0
    %746 = vmatprep.subr.mxu0 0.0
    %747 = vmatpush1.msra.mxu0 %v732
    %748 = vmatprep.subr.mxu0 0.0
    %749 = vmatpush1.msra.mxu0 %v733
    %750 = vmatprep.subr.mxu0 0.0
    %751 = vmatpush1.msra.mxu0 %v734
    %752 = vmatprep.subr.mxu0 0.0
    %753 = vmatpush1.msra.mxu0 %v735
    %754 = vmatprep.subr.mxu0 0.0
    %755 = vmatpush1.msra.mxu0 0.0
    %756 = vmatprep.subr.mxu0 0.0
    %757 = vmatpush1.msra.mxu0 0.0
    %758 = vmatprep.subr.mxu0 0.0
    %759 = vmatpush1.msra.mxu0 0.0
    %760 = vmatprep.subr.mxu0 0.0
    %761 = vmatpush1.msra.mxu0 0.0
    %762 = vmatprep.subr.mxu0 0.0
    %763 = vmatpush1.msra.mxu0 0.0
    %764 = vmatprep.subr.mxu0 0.0
    %765 = vmatpush1.msra.mxu0 0.0
    %766 = vmatprep.subr.mxu0 0.0
    %767 = vmatpush1.msra.mxu0 0.0
    %768 = vmatprep.subr.mxu0 0.0
    %769 = vmatpush1.msra.mxu0 0.0
    %770 = vmatprep.subr.mxu0 0.0
    %771 = vmatpush1.msra.mxu0 0.0
    %772 = vmatprep.subr.mxu0 0.0
    %773 = vmatpush1.msra.mxu0 0.0
    %774 = vmatprep.subr.mxu0 0.0
    %775 = vmatpush1.msra.mxu0 0.0
    %776 = vmatprep.subr.mxu0 0.0
    %777 = vmatpush1.msra.mxu0 0.0
    %778 = vmatprep.subr.mxu0 0.0
    %779 = vmatpush1.msra.mxu0 0.0
    %780 = vmatprep.subr.mxu0 0.0
    %781 = vmatpush1.msra.mxu0 0.0
    %782 = vmatprep.subr.mxu0 0.0
    %783 = vmatpush1.msra.mxu0 0.0
    %784 = vmatprep.subr.mxu0 0.0
    %785 = vmatpush1.msra.mxu0 0.0
    %786 = vmatprep.subr.mxu0 0.0
    %787 = vmatpush1.msra.mxu0 0.0
    %788 = vmatprep.subr.mxu0 0.0
    %789 = vmatpush1.msra.mxu0 0.0
    %790 = vmatprep.subr.mxu0 0.0
    %791 = vmatpush1.msra.mxu0 0.0
    %792 = vmatprep.subr.mxu0 0.0
    %793 = vmatpush1.msra.mxu0 0.0
    %794 = vmatprep.subr.mxu0 0.0
    %795 = vmatpush1.msra.mxu0 0.0
    %796 = vmatprep.subr.mxu0 0.0
    %797 = vmatpush1.msra.mxu0 0.0
    %798 = vmatprep.subr.mxu0 0.0
    %799 = vmatpush1.msra.mxu0 0.0
    %800 = vmatprep.subr.mxu0 0.0
    %801 = vmatpush1.msra.mxu0 0.0
    %802 = vmatprep.subr.mxu0 0.0
    %803 = vmatpush1.msra.mxu0 0.0
    %804 = vmatprep.subr.mxu0 0.0
    %805 = vmatpush1.msra.mxu0 0.0
    %806 = vmatprep.subr.mxu0 0.0
    %807 = vmatpush1.msra.mxu0 0.0
    %808 = vmatprep.subr.mxu0 0.0
    %809 = vmatpush1.msra.mxu0 0.0
    %810 = vmatprep.mubr.f32.mxu0 0.0
    %811 = vmatmul.mubr.f32.gmra.mrb[0].mxu0 %v741
    %v812 = vpop.f32.mrb[0].mxu0
    %v813 = vadd.f32 %v739, %v812
    %v814 = vpop.f32.mrb[0].mxu0
    %815 = vmatprep.mubr.f32.mxu0 0.0
    %816 = vmatmul.mubr.f32.gmra.mrb[0].mxu0 %v744
    %v817 = vpop.f32.mrb[0].mxu0
    %v818 = vadd.f32 %v739, %v817
    %v819 = vpop.f32.mrb[0].mxu0
    %820 = vdwg.mxu0
    %v821 = vmax.f32 %v813, 0.0
    %v822 = vmax.f32 %v818, 0.0
    %v823 = vld [vmem:[%s7] sm:$0xff]
    %v824 = vld [vmem:[%s7 + $0x8] sm:$0xff]
    %v825 = vld [vmem:[%s7 + $0x10] sm:$0xff]
    %v826 = vld [vmem:[%s7 + $0x18] sm:$0xff]
    %v827 = vld [vmem:[%s7 + $0x20] sm:$0xff]
    %v828 = vld [vmem:[%s7 + $0x28] sm:$0xff]
    %v829 = vld [vmem:[%s7 + $0x30] sm:$0xff]
    %v830 = vld [vmem:[%s7 + $0x38] sm:$0xff]
    %v831 = vlaneseq
    %v832 = vshrl.u32 %v831, 7
    %v833 = vsub.s32 5, %v832
    %v834 = vrot.slane %v35, %v833
    %v836 = vsel %vm394, %v821, 0
    %v839 = vsel %vm394, %v822, 0
    %841 = vmatprep.subr.mxu0 0.0
    %842 = vmatpush1.msra.mxu0 %v823
    %843 = vmatprep.subr.mxu0 0.0
    %844 = vmatpush1.msra.mxu0 %v824
    %845 = vmatprep.subr.mxu0 0.0
    %846 = vmatpush1.msra.mxu0 %v825
    %847 = vmatprep.subr.mxu0 0.0
    %848 = vmatpush1.msra.mxu0 %v826
    %849 = vmatprep.subr.mxu0 0.0
    %850 = vmatpush1.msra.mxu0 %v827
    %851 = vmatprep.subr.mxu0 0.0
    %852 = vmatpush1.msra.mxu0 %v828
    %853 = vmatprep.subr.mxu0 0.0
    %854 = vmatpush1.msra.mxu0 %v829
    %855 = vmatprep.subr.mxu0 0.0
    %856 = vmatpush1.msra.mxu0 %v830
    %857 = vmatprep.subr.mxu0 0.0
    %858 = vmatpush1.msra.mxu0 0.0
    %859 = vmatprep.subr.mxu0 0.0
    %860 = vmatpush1.msra.mxu0 0.0
    %861 = vmatprep.subr.mxu0 0.0
    %862 = vmatpush1.msra.mxu0 0.0
    %863 = vmatprep.subr.mxu0 0.0
    %864 = vmatpush1.msra.mxu0 0.0
    %865 = vmatprep.subr.mxu0 0.0
    %866 = vmatpush1.msra.mxu0 0.0
    %867 = vmatprep.subr.mxu0 0.0
    %868 = vmatpush1.msra.mxu0 0.0
    %869 = vmatprep.subr.mxu0 0.0
    %870 = vmatpush1.msra.mxu0 0.0
    %871 = vmatprep.subr.mxu0 0.0
    %872 = vmatpush1.msra.mxu0 0.0
    %873 = vmatprep.subr.mxu0 0.0
    %874 = vmatpush1.msra.mxu0 0.0
    %875 = vmatprep.subr.mxu0 0.0
    %876 = vmatpush1.msra.mxu0 0.0
    %877 = vmatprep.subr.mxu0 0.0
    %878 = vmatpush1.msra.mxu0 0.0
    %879 = vmatprep.subr.mxu0 0.0
    %880 = vmatpush1.msra.mxu0 0.0
    %881 = vmatprep.subr.mxu0 0.0
    %882 = vmatpush1.msra.mxu0 0.0
    %883 = vmatprep.subr.mxu0 0.0
    %884 = vmatpush1.msra.mxu0 0.0
    %885 = vmatprep.subr.mxu0 0.0
    %886 = vmatpush1.msra.mxu0 0.0
    %887 = vmatprep.subr.mxu0 0.0
    %888 = vmatpush1.msra.mxu0 0.0
    %889 = vmatprep.subr.mxu0 0.0
    %890 = vmatpush1.msra.mxu0 0.0
    %891 = vmatprep.subr.mxu0 0.0
    %892 = vmatpush1.msra.mxu0 0.0
    %893 = vmatprep.subr.mxu0 0.0
    %894 = vmatpush1.msra.mxu0 0.0
    %895 = vmatprep.subr.mxu0 0.0
    %896 = vmatpush1.msra.mxu0 0.0
    %897 = vmatprep.subr.mxu0 0.0
    %898 = vmatpush1.msra.mxu0 0.0
    %899 = vmatprep.subr.mxu0 0.0
    %900 = vmatpush1.msra.mxu0 0.0
    %901 = vmatprep.subr.mxu0 0.0
    %902 = vmatpush1.msra.mxu0 0.0
    %903 = vmatprep.subr.mxu0 0.0
    %904 = vmatpush1.msra.mxu0 0.0
    %905 = vmatprep.mubr.f32.mxu0 0.0
    %906 = vmatmul.mubr.f32.gmra.mrb[0].mxu0 %v836
    %v907 = vpop.f32.mrb[0].mxu0
    %v908 = vadd.f32 %v834, %v907
    %v909 = vpop.f32.mrb[0].mxu0
    %910 = vmatprep.mubr.f32.mxu0 0.0
    %911 = vmatmul.mubr.f32.gmra.mrb[0].mxu0 %v839
    %v912 = vpop.f32.mrb[0].mxu0
    %v913 = vadd.f32 %v834, %v912
    %v914 = vpop.f32.mrb[0].mxu0
    %915 = vdwg.mxu0
    %v916 = vadd.f32 %v678, %v908
    %v917 = vadd.f32 %v679, %v913
    %918 = vst.msk [vmem:[#allocation2] sm:$0xff] %vm36, %v916
    %919 = vst.msk [vmem:[#allocation2 + $0x8] sm:$0xff] %vm36, %v917
    // Predicated region
    $region38: #{encoder_block.1} parent=1 // pred_check
      _
    $region39: #{encoder_block.1} parent=1 // pred_check_branch
      %921 = sbr.rel (0) target = $region41
    $region40: #{encoder_block.1} parent=1 // pred_region
      %s923 = ssub.s32 256, 256
      %924 = vsyncadd [#allocation3], %s923
      %s925 = sshll.u32 [#allocation2], 4
      %s926 = int_to_ptr.vmem [resolvable:$true] %s925
      %931 = dma.vmem_to_hbm [thread:$0]  %s926, 256, %s9, [#allocation3], 128, 128, 8
    $region41: #{encoder_block.1} parent=1 // pred_fallthru
      _
    // Predicated region
    $region42: #{encoder_block.1} parent=1 // pred_check
      _
    $region43: #{encoder_block.1} parent=1 // pred_check_branch
      %933 = sbr.rel (0) target = $region45
    $region44: #{encoder_block.1} parent=1 // pred_region
      %934 = dma.done [#allocation3], 256
    $region45: #{encoder_block.1} parent=1 // pred_fallthru
      _
    %935 = vsyncpa [#allocation3], 1

</llo_original>
